<compile_context>
chip_gen: v7x
topology: tpu7x:2x2x1
jax: 0.10.0
libtpu: 0.0.40
codegen_flags: <defaults>
</compile_context>

<pallas_src>
import jax
import jax.numpy as jnp
from jax.experimental import pallas as pl
from jax.experimental.pallas import tpu as pltpu


def _round_up(n: int, m: int) -> int:
    return ((n + m - 1) // m) * m


def mlp_head_kernel(x_ref, w1_ref, b1_ref, w2_ref, b2_ref, g_ref, o_ref):
    # x_ref: (tb_p, P*dim_in) packed batch tile.  Matmuls run in the streamed
    # input dtype (f32 default, bf16 if the caller streams bf16) with f32
    # accumulation; bias / ReLU / normalize are all f32 elementwise.
    x = x_ref[...]
    h = jnp.dot(x, w1_ref[...], preferred_element_type=jnp.float32) + b1_ref[...]
    h = jnp.maximum(h, 0.0)
    y = jnp.dot(h.astype(w2_ref.dtype), w2_ref[...],
                preferred_element_type=jnp.float32) + b2_ref[...]

    # Per-original-row L2 normalize.  Each original row occupies a contiguous
    # group of dim_feat lanes; the 0/1 group matrix sums the squares within
    # each group and broadcasts the sum back to every lane of that group
    # (MXU work, avoids a lane-sparse cross-lane reduction).
    gsum = jnp.dot(y * y, g_ref[...], preferred_element_type=jnp.float32)

    # F.normalize(p=2, dim=1, eps=1e-12): y / max(||y||, 1e-12)
    #   == y * rsqrt(max(||y||^2, 1e-24))   (1e-24 is representable in f32)
    inv = jax.lax.rsqrt(jnp.maximum(gsum, 1e-24))
    o_ref[...] = (y * inv).astype(o_ref.dtype)


def mlp_head(x, w1, b1, w2, b2, *, tile_b=8192):
    """x: (B, dim_in); w1: (dim_in, dim_h); b1: (1, dim_h);
    w2: (dim_h, dim_feat); b2: (1, dim_feat) -> (B, dim_feat).

    Pass bf16 x to halve streamed HBM bytes (output is then bf16 too)."""
    B, dim_in = x.shape
    dim_h = w1.shape[1]
    dim_feat = w2.shape[1]
    out_dtype = x.dtype

    # Lane-pack factor: put P original rows side-by-side along the lane dim so
    # VPU ops and output stores see 128/64-wide rows instead of 32/16-wide.
    P = 128 // dim_in if (dim_in <= 128 and 128 % dim_in == 0) else 1

    # Pad the batch only to a multiple of the (tiny) pack factor, never to a
    # tile multiple (avoids a full extra HBM copy of x in the common case).
    Bp = _round_up(B, P)
    if Bp != B:
        x = jnp.pad(x, ((0, Bp - B), (0, 0)))
    Rp = Bp // P
    xp = x.reshape(Rp, P * dim_in)  # free view for a contiguous row-major array

    # Packed block-diagonal weights, tiled biases, lane-group-sum matrix.
    wdt = x.dtype
    eye = jnp.eye(P, dtype=jnp.float32)
    w1p = jnp.kron(eye, w1.astype(jnp.float32)).astype(wdt)   # (P*din, P*dh)
    w2p = jnp.kron(eye, w2.astype(jnp.float32)).astype(wdt)   # (P*dh,  P*df)
    b1p = jnp.tile(b1.astype(jnp.float32).reshape(1, dim_h), (1, P))
    b2p = jnp.tile(b2.astype(jnp.float32).reshape(1, dim_feat), (1, P))
    gmat = jnp.kron(eye, jnp.ones((dim_feat, dim_feat), jnp.float32))

    # Packed-row tile: multiple of 8 sublanes, large to amortize the
    # ~0.35 us/grid-step overhead (2048x128 f32 x tile = 1 MiB; double-buffered
    # x + out ~3 MiB, fine on v5e/v6e/v7x scoped VMEM).
    tb_p = max(8, _round_up(tile_b, 8 * P) // P)
    tb_p = min(tb_p, _round_up(Rp, 8))
    n_blocks = pl.cdiv(Rp, tb_p)
    if n_blocks == 1 and Rp > 8:
        # Keep >= 2 grid steps so the batch axis can split across 2 TCs (v7x).
        tb_p = _round_up(pl.cdiv(Rp, 2), 8)
        n_blocks = pl.cdiv(Rp, tb_p)

    out_p = pl.pallas_call(
        mlp_head_kernel,
        out_shape=jax.ShapeDtypeStruct((Rp, P * dim_feat), out_dtype),
        grid_spec=pltpu.PrefetchScalarGridSpec(
            num_scalar_prefetch=0,
            grid=(n_blocks,),
            in_specs=[
                pl.BlockSpec((tb_p, P * dim_in), lambda i: (i, 0)),         # streamed x
                pl.BlockSpec((P * dim_in, P * dim_h), lambda i: (0, 0)),    # resident W1'
                pl.BlockSpec((1, P * dim_h), lambda i: (0, 0)),             # resident b1'
                pl.BlockSpec((P * dim_h, P * dim_feat), lambda i: (0, 0)),  # resident W2'
                pl.BlockSpec((1, P * dim_feat), lambda i: (0, 0)),          # resident b2'
                pl.BlockSpec((P * dim_feat, P * dim_feat), lambda i: (0, 0)),  # resident G
            ],
            out_specs=pl.BlockSpec((tb_p, P * dim_feat), lambda i: (i, 0)),
        ),
        compiler_params=pltpu.CompilerParams(
            dimension_semantics=("parallel",),  # batch axis -> megacore sharding
        ),
    )(xp, w1p, b1p, w2p, b2p, gmat)

    out = out_p.reshape(Bp, dim_feat)
    return out[:B] if Bp != B else out


def reference(x, w1, b1, w2, b2):
    h = jnp.maximum(x @ w1 + b1, 0.0)
    y = h @ w2 + b2
    n = jnp.maximum(jnp.linalg.norm(y, axis=1, keepdims=True), 1e-12)
    return y / n


if __name__ == "__main__":
    # Shapes consistent with MLPHead(dim_in=32, dim_feat=16) (dim_h defaults
    # to dim_in).
    dim_in, dim_feat = 32, 16
    dim_h = dim_in

    key = jax.random.PRNGKey(0)
    kx, k1, kb1, k2, kb2 = jax.random.split(key, 5)

    # PyTorch stores Linear weights as (out, in); kept pre-transposed (in, out).
    w1 = jax.random.normal(k1, (dim_in, dim_h), dtype=jnp.float32) * 0.1
    b1 = jax.random.normal(kb1, (1, dim_h), dtype=jnp.float32) * 0.1
    w2 = jax.random.normal(k2, (dim_h, dim_feat), dtype=jnp.float32) * 0.1
    b2 = jax.random.normal(kb2, (1, dim_feat), dtype=jnp.float32) * 0.1

    # Check 1: small batch, default tile, f32 (exact path vs PyTorch semantics).
    B = 8
    x = jax.random.normal(kx, (B, dim_in), dtype=jnp.float32)
    out = jax.block_until_ready(mlp_head(x, w1, b1, w2, b2))
    ref = reference(x, w1, b1, w2, b2)
    assert out.shape == (B, dim_feat)
    assert jnp.allclose(out, ref, atol=1e-5, rtol=1e-5), "f32 mismatch (B=8)"

    # Check 2: batch not a multiple of the pack factor (pad path), single block.
    B = 13
    x = jax.random.normal(kx, (B, dim_in), dtype=jnp.float32)
    out = jax.block_until_ready(mlp_head(x, w1, b1, w2, b2))
    ref = reference(x, w1, b1, w2, b2)
    assert out.shape == (B, dim_feat)
    assert jnp.allclose(out, ref, atol=1e-5, rtol=1e-5), "f32 mismatch (B=13)"

    # Check 3: multi-step grid with a ragged last block (small tile on purpose).
    B = 40
    x = jax.random.normal(kx, (B, dim_in), dtype=jnp.float32)
    out = jax.block_until_ready(mlp_head(x, w1, b1, w2, b2, tile_b=32))
    ref = reference(x, w1, b1, w2, b2)
    assert out.shape == (B, dim_feat)
    assert jnp.allclose(out, ref, atol=1e-5, rtol=1e-5), "f32 mismatch (B=40, tiled)"

    # Check 4: bf16 streamed activations (opt-in fast path, loose tolerance).
    x_bf = x.astype(jnp.bfloat16)
    out_bf = jax.block_until_ready(mlp_head(x_bf, w1, b1, w2, b2))
    assert out_bf.shape == (B, dim_feat)
    assert jnp.allclose(out_bf.astype(jnp.float32), ref, atol=5e-2, rtol=5e-2), \
        "bf16 mismatch vs reference"

    print("KERNEL_OK")
</pallas_src>

<mosaic_0001>
module attributes {stable_mosaic.version = 11 : i64} {
  func.func @mlp_head_kernel(%arg0: i32, %arg1: memref<8x128xf32, #tpu.memory_space<vmem>>, %arg2: memref<128x128xf32, #tpu.memory_space<vmem>>, %arg3: memref<1x128xf32, #tpu.memory_space<vmem>>, %arg4: memref<128x64xf32, #tpu.memory_space<vmem>>, %arg5: memref<1x64xf32, #tpu.memory_space<vmem>>, %arg6: memref<64x64xf32, #tpu.memory_space<vmem>>, %arg7: memref<8x64xf32, #tpu.memory_space<vmem>>) attributes {dimension_semantics = [#tpu.dimension_semantics<parallel>], iteration_bounds = array<i64: 1>, scalar_prefetch = 0 : i64, scratch_operands = 0 : i64, tpu.core_type = #tpu.core_type<tc>, window_params = [{transform_indices = @transform_0, window_bounds = array<i64: 8, 128>}, {pipeline_mode = #tpu.pipeline_mode<synchronous>, transform_indices = @transform_1, window_bounds = array<i64: 128, 128>}, {pipeline_mode = #tpu.pipeline_mode<synchronous>, transform_indices = @transform_2, window_bounds = array<i64: 1, 128>}, {pipeline_mode = #tpu.pipeline_mode<synchronous>, transform_indices = @transform_3, window_bounds = array<i64: 128, 64>}, {pipeline_mode = #tpu.pipeline_mode<synchronous>, transform_indices = @transform_4, window_bounds = array<i64: 1, 64>}, {pipeline_mode = #tpu.pipeline_mode<synchronous>, transform_indices = @transform_5, window_bounds = array<i64: 64, 64>}, {transform_indices = @transform_6, window_bounds = array<i64: 8, 64>}]} {
    %c0 = arith.constant 0 : index
    %c0_0 = arith.constant 0 : index
    %0 = vector.load %arg1[%c0, %c0_0] : memref<8x128xf32, #tpu.memory_space<vmem>>, vector<8x128xf32>
    %c0_1 = arith.constant 0 : index
    %c0_2 = arith.constant 0 : index
    %1 = vector.load %arg2[%c0_1, %c0_2] : memref<128x128xf32, #tpu.memory_space<vmem>>, vector<128x128xf32>
    %cst = arith.constant dense<0.000000e+00> : vector<8x128xf32>
    %2 = tpu.matmul %0, %1, %cst {dimension_numbers = #tpu.dot_dimension_numbers<[1], [0], [0], [1], [0, 0, 1, 1], [], []>} : vector<8x128xf32>, vector<128x128xf32>, vector<8x128xf32> -> vector<8x128xf32>
    %c0_3 = arith.constant 0 : index
    %c0_4 = arith.constant 0 : index
    %3 = vector.load %arg3[%c0_3, %c0_4] : memref<1x128xf32, #tpu.memory_space<vmem>>, vector<1x128xf32>
    %4 = vector.broadcast %3 : vector<1x128xf32> to vector<8x128xf32>
    %5 = arith.addf %2, %4 : vector<8x128xf32>
    %cst_5 = arith.constant 0.000000e+00 : f32
    %6 = vector.broadcast %cst_5 : f32 to vector<8x128xf32>
    %7 = arith.maximumf %5, %6 : vector<8x128xf32>
    %c0_6 = arith.constant 0 : index
    %c0_7 = arith.constant 0 : index
    %8 = vector.load %arg4[%c0_6, %c0_7] : memref<128x64xf32, #tpu.memory_space<vmem>>, vector<128x64xf32>
    %cst_8 = arith.constant dense<0.000000e+00> : vector<8x64xf32>
    %9 = tpu.matmul %7, %8, %cst_8 {dimension_numbers = #tpu.dot_dimension_numbers<[1], [0], [0], [1], [0, 0, 1, 1], [], []>} : vector<8x128xf32>, vector<128x64xf32>, vector<8x64xf32> -> vector<8x64xf32>
    %c0_9 = arith.constant 0 : index
    %c0_10 = arith.constant 0 : index
    %10 = vector.load %arg5[%c0_9, %c0_10] : memref<1x64xf32, #tpu.memory_space<vmem>>, vector<1x64xf32>
    %11 = vector.broadcast %10 : vector<1x64xf32> to vector<8x64xf32>
    %12 = arith.addf %9, %11 : vector<8x64xf32>
    %13 = arith.mulf %12, %12 : vector<8x64xf32>
    %c0_11 = arith.constant 0 : index
    %c0_12 = arith.constant 0 : index
    %14 = vector.load %arg6[%c0_11, %c0_12] : memref<64x64xf32, #tpu.memory_space<vmem>>, vector<64x64xf32>
    %cst_13 = arith.constant dense<0.000000e+00> : vector<8x64xf32>
    %15 = tpu.matmul %13, %14, %cst_13 {dimension_numbers = #tpu.dot_dimension_numbers<[1], [0], [0], [1], [0, 0, 1, 1], [], []>} : vector<8x64xf32>, vector<64x64xf32>, vector<8x64xf32> -> vector<8x64xf32>
    %cst_14 = arith.constant 1.000000e-24 : f32
    %16 = vector.broadcast %cst_14 : f32 to vector<8x64xf32>
    %17 = arith.maximumf %15, %16 : vector<8x64xf32>
    %18 = math.rsqrt %17 : vector<8x64xf32>
    %19 = arith.mulf %12, %18 : vector<8x64xf32>
    %c0_15 = arith.constant 0 : index
    %c0_16 = arith.constant 0 : index
    %20 = vector.load %arg7[%c0_15, %c0_16] : memref<8x64xf32, #tpu.memory_space<vmem>>, vector<8x64xf32>
    tpu.vector_store %arg7[%c0_15, %c0_16], %19 {strides = array<i32>} : memref<8x64xf32, #tpu.memory_space<vmem>>, vector<8x64xf32>,
    return
  }
  func.func @transform_0(%arg0: i32) -> (i32, i32) {
    %c0_i32 = arith.constant 0 : i32
    %c0_i32_0 = arith.constant 0 : i32
    return %arg0, %c0_i32 : i32, i32
  }
  func.func @transform_1(%arg0: i32) -> (i32, i32) {
    %c0_i32 = arith.constant 0 : i32
    %c0_i32_0 = arith.constant 0 : i32
    %c0_i32_1 = arith.constant 0 : i32
    return %c0_i32, %c0_i32_0 : i32, i32
  }
  func.func @transform_2(%arg0: i32) -> (i32, i32) {
    %c0_i32 = arith.constant 0 : i32
    %c0_i32_0 = arith.constant 0 : i32
    %c0_i32_1 = arith.constant 0 : i32
    return %c0_i32, %c0_i32_0 : i32, i32
  }
  func.func @transform_3(%arg0: i32) -> (i32, i32) {
    %c0_i32 = arith.constant 0 : i32
    %c0_i32_0 = arith.constant 0 : i32
    %c0_i32_1 = arith.constant 0 : i32
    return %c0_i32, %c0_i32_0 : i32, i32
  }
  func.func @transform_4(%arg0: i32) -> (i32, i32) {
    %c0_i32 = arith.constant 0 : i32
    %c0_i32_0 = arith.constant 0 : i32
    %c0_i32_1 = arith.constant 0 : i32
    return %c0_i32, %c0_i32_0 : i32, i32
  }
  func.func @transform_5(%arg0: i32) -> (i32, i32) {
    %c0_i32 = arith.constant 0 : i32
    %c0_i32_0 = arith.constant 0 : i32
    %c0_i32_1 = arith.constant 0 : i32
    return %c0_i32, %c0_i32_0 : i32, i32
  }
  func.func @transform_6(%arg0: i32) -> (i32, i32) {
    %c0_i32 = arith.constant 0 : i32
    %c0_i32_0 = arith.constant 0 : i32
    return %arg0, %c0_i32 : i32, i32
  }
}

</mosaic_0001>

<llo_original>
// kernel: tpu_custom_call.1
$region0: #{tpu_custom_call.1}
  #allocation0 [shape = 'u32[]', space=smem, size = 0x4, offset = 0x4, fixed_abs, tag = 'smem constant byte address 0x4 - core index']
  #allocation1 [shape = 'u32[144,128]{1,0:T(1,128)}', space=vmem, size = 0x12000, scoped, tag = 'internal scratch']
  %s0 = inlined_call_operand.vmem [shape: f32[2,128], index: 0, kind: input, shape index: {}]
  %s1 = inlined_call_operand.vmem [shape: f32[128,128], index: 1, kind: input, shape index: {}]
  %s2 = inlined_call_operand.vmem [shape: f32[1,128], index: 2, kind: input, shape index: {}]
  %s3 = inlined_call_operand.vmem [shape: f32[128,64], index: 3, kind: input, shape index: {}]
  %s4 = inlined_call_operand.vmem [shape: f32[1,64], index: 4, kind: input, shape index: {}]
  %s5 = inlined_call_operand.vmem [shape: f32[64,64], index: 5, kind: input, shape index: {}]
  %s6 = inlined_call_operand.hbm [shape: f32[2,64], index: 6, kind: output, shape index: {}]
  %s7 = sld [smem:[#allocation0]]
  $region34: #{tpu_custom_call.1} parent=0
    _
  %s9 = ssub.s32 1, %s7
  %s10 = scalar_select 0, %s9, %s7
  $region1: #{tpu_custom_call.1} parent=0
    #allocation2 [shape = 'u8[4096]{0}', space=vmem, size = 0x1000, scoped, tag = 'output window, operand 0, single buffered']
    #allocation3 [shape = 's32[1]{0}', space=sflag, size = 0x4, scoped, tag = 'scoped memory for tpu_custom_call.1']
    %11 = vsyncpa [#allocation3], 0
    // Predicated region
    $region2: #{tpu_custom_call.1} parent=1 // pred_check
      _
    $region3: #{tpu_custom_call.1} parent=1 // pred_check_branch
      %13 = sbr.rel (0) target = $region5
    $region4: #{tpu_custom_call.1} parent=1 // pred_region
      _
    $region5: #{tpu_custom_call.1} parent=1 // pred_fallthru
      _
    // Predicated region
    $region6: #{tpu_custom_call.1} parent=1 // pred_check
      _
    $region7: #{tpu_custom_call.1} parent=1 // pred_check_branch
      %15 = sbr.rel (0) target = $region9
    $region8: #{tpu_custom_call.1} parent=1 // pred_region
      _
    $region9: #{tpu_custom_call.1} parent=1 // pred_fallthru
      _
    // Predicated region
    $region10: #{tpu_custom_call.1} parent=1 // pred_check
      _
    $region11: #{tpu_custom_call.1} parent=1 // pred_check_branch
      %17 = sbr.rel (0) target = $region13
    $region12: #{tpu_custom_call.1} parent=1 // pred_region
      _
    $region13: #{tpu_custom_call.1} parent=1 // pred_fallthru
      _
    // Predicated region
    $region14: #{tpu_custom_call.1} parent=1 // pred_check
      _
    $region15: #{tpu_custom_call.1} parent=1 // pred_check_branch
      %19 = sbr.rel (0) target = $region17
    $region16: #{tpu_custom_call.1} parent=1 // pred_region
      _
    $region17: #{tpu_custom_call.1} parent=1 // pred_fallthru
      _
    // Predicated region
    $region18: #{tpu_custom_call.1} parent=1 // pred_check
      _
    $region19: #{tpu_custom_call.1} parent=1 // pred_check_branch
      %21 = sbr.rel (0) target = $region21
    $region20: #{tpu_custom_call.1} parent=1 // pred_region
      _
    $region21: #{tpu_custom_call.1} parent=1 // pred_fallthru
      _
    // Predicated region
    $region22: #{tpu_custom_call.1} parent=1 // pred_check
      _
    $region23: #{tpu_custom_call.1} parent=1 // pred_check_branch
      %23 = sbr.rel (0) target = $region25
    $region24: #{tpu_custom_call.1} parent=1 // pred_region
      _
    $region25: #{tpu_custom_call.1} parent=1 // pred_fallthru
      _
    %v24 = vld [vmem:[%s0] sm:$0xff]
    %v25 = vld [vmem:[%s1] sm:$0xff]
    %v26 = vld [vmem:[%s1 + $0x8] sm:$0xff]
    %v27 = vld [vmem:[%s1 + $0x10] sm:$0xff]
    %v28 = vld [vmem:[%s1 + $0x18] sm:$0xff]
    %v29 = vld [vmem:[%s1 + $0x20] sm:$0xff]
    %v30 = vld [vmem:[%s1 + $0x28] sm:$0xff]
    %v31 = vld [vmem:[%s1 + $0x30] sm:$0xff]
    %v32 = vld [vmem:[%s1 + $0x38] sm:$0xff]
    %v33 = vld [vmem:[%s1 + $0x40] sm:$0xff]
    %v34 = vld [vmem:[%s1 + $0x48] sm:$0xff]
    %v35 = vld [vmem:[%s1 + $0x50] sm:$0xff]
    %v36 = vld [vmem:[%s1 + $0x58] sm:$0xff]
    %v37 = vld [vmem:[%s1 + $0x60] sm:$0xff]
    %v38 = vld [vmem:[%s1 + $0x68] sm:$0xff]
    %v39 = vld [vmem:[%s1 + $0x70] sm:$0xff]
    %v40 = vld [vmem:[%s1 + $0x78] sm:$0xff]
    %v41 = vld [vmem:[%s2] sm:$0x1]
    %v43 = vlaneseq
    %v44 = vshrl.u32 %v43, 7
    %v45 = vsub.s32 0, %v44
    %v46 = vrot.slane %v41, %v45
    %48 = vmatprep.subr.mxu0 0.0
    %49 = vmatpush1.msra.mxu0 %v25
    %50 = vmatprep.subr.mxu0 0.0
    %51 = vmatpush1.msra.mxu0 %v26
    %52 = vmatprep.subr.mxu0 0.0
    %53 = vmatpush1.msra.mxu0 %v27
    %54 = vmatprep.subr.mxu0 0.0
    %55 = vmatpush1.msra.mxu0 %v28
    %56 = vmatprep.subr.mxu0 0.0
    %57 = vmatpush1.msra.mxu0 %v29
    %58 = vmatprep.subr.mxu0 0.0
    %59 = vmatpush1.msra.mxu0 %v30
    %60 = vmatprep.subr.mxu0 0.0
    %61 = vmatpush1.msra.mxu0 %v31
    %62 = vmatprep.subr.mxu0 0.0
    %63 = vmatpush1.msra.mxu0 %v32
    %64 = vmatprep.subr.mxu0 0.0
    %65 = vmatpush1.msra.mxu0 %v33
    %66 = vmatprep.subr.mxu0 0.0
    %67 = vmatpush1.msra.mxu0 %v34
    %68 = vmatprep.subr.mxu0 0.0
    %69 = vmatpush1.msra.mxu0 %v35
    %70 = vmatprep.subr.mxu0 0.0
    %71 = vmatpush1.msra.mxu0 %v36
    %72 = vmatprep.subr.mxu0 0.0
    %73 = vmatpush1.msra.mxu0 %v37
    %74 = vmatprep.subr.mxu0 0.0
    %75 = vmatpush1.msra.mxu0 %v38
    %76 = vmatprep.subr.mxu0 0.0
    %77 = vmatpush1.msra.mxu0 %v39
    %78 = vmatprep.subr.mxu0 0.0
    %79 = vmatpush1.msra.mxu0 %v40
    %80 = vmatprep.subr.mxu0 0.0
    %81 = vmatpush1.msra.mxu0 0.0
    %82 = vmatprep.subr.mxu0 0.0
    %83 = vmatpush1.msra.mxu0 0.0
    %84 = vmatprep.subr.mxu0 0.0
    %85 = vmatpush1.msra.mxu0 0.0
    %86 = vmatprep.subr.mxu0 0.0
    %87 = vmatpush1.msra.mxu0 0.0
    %88 = vmatprep.subr.mxu0 0.0
    %89 = vmatpush1.msra.mxu0 0.0
    %90 = vmatprep.subr.mxu0 0.0
    %91 = vmatpush1.msra.mxu0 0.0
    %92 = vmatprep.subr.mxu0 0.0
    %93 = vmatpush1.msra.mxu0 0.0
    %94 = vmatprep.subr.mxu0 0.0
    %95 = vmatpush1.msra.mxu0 0.0
    %96 = vmatprep.subr.mxu0 0.0
    %97 = vmatpush1.msra.mxu0 0.0
    %98 = vmatprep.subr.mxu0 0.0
    %99 = vmatpush1.msra.mxu0 0.0
    %100 = vmatprep.subr.mxu0 0.0
    %101 = vmatpush1.msra.mxu0 0.0
    %102 = vmatprep.subr.mxu0 0.0
    %103 = vmatpush1.msra.mxu0 0.0
    %104 = vmatprep.subr.mxu0 0.0
    %105 = vmatpush1.msra.mxu0 0.0
    %106 = vmatprep.subr.mxu0 0.0
    %107 = vmatpush1.msra.mxu0 0.0
    %108 = vmatprep.subr.mxu0 0.0
    %109 = vmatpush1.msra.mxu0 0.0
    %110 = vmatprep.subr.mxu0 0.0
    %111 = vmatpush1.msra.mxu0 0.0
    %112 = vmatprep.mubr.f32.mxu0 0.0
    %113 = vmatmul.mubr.f32.gmra.mrb[0].mxu0 %v24
    %v114 = vpop.f32.mrb[0].mxu0
    %v115 = vadd.f32 %v46, %v114
    %v116 = vpop.f32.mrb[0].mxu0
    %117 = vdwg.mxu0
    %v118 = vmax.f32 %v115, 0.0
    %v119 = vld [vmem:[%s3] sm:$0xff]
    %v120 = vld [vmem:[%s3 + $0x8] sm:$0xff]
    %v121 = vld [vmem:[%s3 + $0x10] sm:$0xff]
    %v122 = vld [vmem:[%s3 + $0x18] sm:$0xff]
    %v123 = vld [vmem:[%s3 + $0x20] sm:$0xff]
    %v124 = vld [vmem:[%s3 + $0x28] sm:$0xff]
    %v125 = vld [vmem:[%s3 + $0x30] sm:$0xff]
    %v126 = vld [vmem:[%s3 + $0x38] sm:$0xff]
    %v127 = vld [vmem:[%s3 + $0x40] sm:$0xff]
    %v128 = vld [vmem:[%s3 + $0x48] sm:$0xff]
    %v129 = vld [vmem:[%s3 + $0x50] sm:$0xff]
    %v130 = vld [vmem:[%s3 + $0x58] sm:$0xff]
    %v131 = vld [vmem:[%s3 + $0x60] sm:$0xff]
    %v132 = vld [vmem:[%s3 + $0x68] sm:$0xff]
    %v133 = vld [vmem:[%s3 + $0x70] sm:$0xff]
    %v134 = vld [vmem:[%s3 + $0x78] sm:$0xff]
    %v135 = vld [vmem:[%s4] sm:$0x1]
    %v137 = vlaneseq
    %v138 = vshrl.u32 %v137, 7
    %v139 = vsub.s32 0, %v138
    %v140 = vrot.slane %v135, %v139
    %142 = vmatprep.subr.mxu0 0.0
    %143 = vmatpush1.msra.mxu0 %v119
    %144 = vmatprep.subr.mxu0 0.0
    %145 = vmatpush1.msra.mxu0 %v120
    %146 = vmatprep.subr.mxu0 0.0
    %147 = vmatpush1.msra.mxu0 %v121
    %148 = vmatprep.subr.mxu0 0.0
    %149 = vmatpush1.msra.mxu0 %v122
    %150 = vmatprep.subr.mxu0 0.0
    %151 = vmatpush1.msra.mxu0 %v123
    %152 = vmatprep.subr.mxu0 0.0
    %153 = vmatpush1.msra.mxu0 %v124
    %154 = vmatprep.subr.mxu0 0.0
    %155 = vmatpush1.msra.mxu0 %v125
    %156 = vmatprep.subr.mxu0 0.0
    %157 = vmatpush1.msra.mxu0 %v126
    %158 = vmatprep.subr.mxu0 0.0
    %159 = vmatpush1.msra.mxu0 %v127
    %160 = vmatprep.subr.mxu0 0.0
    %161 = vmatpush1.msra.mxu0 %v128
    %162 = vmatprep.subr.mxu0 0.0
    %163 = vmatpush1.msra.mxu0 %v129
    %164 = vmatprep.subr.mxu0 0.0
    %165 = vmatpush1.msra.mxu0 %v130
    %166 = vmatprep.subr.mxu0 0.0
    %167 = vmatpush1.msra.mxu0 %v131
    %168 = vmatprep.subr.mxu0 0.0
    %169 = vmatpush1.msra.mxu0 %v132
    %170 = vmatprep.subr.mxu0 0.0
    %171 = vmatpush1.msra.mxu0 %v133
    %172 = vmatprep.subr.mxu0 0.0
    %173 = vmatpush1.msra.mxu0 %v134
    %174 = vmatprep.subr.mxu0 0.0
    %175 = vmatpush1.msra.mxu0 0.0
    %176 = vmatprep.subr.mxu0 0.0
    %177 = vmatpush1.msra.mxu0 0.0
    %178 = vmatprep.subr.mxu0 0.0
    %179 = vmatpush1.msra.mxu0 0.0
    %180 = vmatprep.subr.mxu0 0.0
    %181 = vmatpush1.msra.mxu0 0.0
    %182 = vmatprep.subr.mxu0 0.0
    %183 = vmatpush1.msra.mxu0 0.0
    %184 = vmatprep.subr.mxu0 0.0
    %185 = vmatpush1.msra.mxu0 0.0
    %186 = vmatprep.subr.mxu0 0.0
    %187 = vmatpush1.msra.mxu0 0.0
    %188 = vmatprep.subr.mxu0 0.0
    %189 = vmatpush1.msra.mxu0 0.0
    %190 = vmatprep.subr.mxu0 0.0
    %191 = vmatpush1.msra.mxu0 0.0
    %192 = vmatprep.subr.mxu0 0.0
    %193 = vmatpush1.msra.mxu0 0.0
    %194 = vmatprep.subr.mxu0 0.0
    %195 = vmatpush1.msra.mxu0 0.0
    %196 = vmatprep.subr.mxu0 0.0
    %197 = vmatpush1.msra.mxu0 0.0
    %198 = vmatprep.subr.mxu0 0.0
    %199 = vmatpush1.msra.mxu0 0.0
    %200 = vmatprep.subr.mxu0 0.0
    %201 = vmatpush1.msra.mxu0 0.0
    %202 = vmatprep.subr.mxu0 0.0
    %203 = vmatpush1.msra.mxu0 0.0
    %204 = vmatprep.subr.mxu0 0.0
    %205 = vmatpush1.msra.mxu0 0.0
    %206 = vmatprep.mubr.f32.mxu0 0.0
    %207 = vmatmul.mubr.f32.gmra.mrb[0].mxu0 %v118
    %v208 = vpop.f32.mrb[0].mxu0
    %v209 = vadd.f32 %v140, %v208
    %v210 = vpop.f32.mrb[0].mxu0
    %211 = vdwg.mxu0
    %v212 = vmul.f32 %v209, %v209
    %v213 = vld [vmem:[%s5] sm:$0xff]
    %v214 = vld [vmem:[%s5 + $0x8] sm:$0xff]
    %v215 = vld [vmem:[%s5 + $0x10] sm:$0xff]
    %v216 = vld [vmem:[%s5 + $0x18] sm:$0xff]
    %v217 = vld [vmem:[%s5 + $0x20] sm:$0xff]
    %v218 = vld [vmem:[%s5 + $0x28] sm:$0xff]
    %v219 = vld [vmem:[%s5 + $0x30] sm:$0xff]
    %v220 = vld [vmem:[%s5 + $0x38] sm:$0xff]
    %vm221 = vcmask 523264
    %v223 = vsel %vm221, %v212, 0
    %225 = vmatprep.subr.mxu0 0.0
    %226 = vmatpush1.msra.mxu0 %v213
    %227 = vmatprep.subr.mxu0 0.0
    %228 = vmatpush1.msra.mxu0 %v214
    %229 = vmatprep.subr.mxu0 0.0
    %230 = vmatpush1.msra.mxu0 %v215
    %231 = vmatprep.subr.mxu0 0.0
    %232 = vmatpush1.msra.mxu0 %v216
    %233 = vmatprep.subr.mxu0 0.0
    %234 = vmatpush1.msra.mxu0 %v217
    %235 = vmatprep.subr.mxu0 0.0
    %236 = vmatpush1.msra.mxu0 %v218
    %237 = vmatprep.subr.mxu0 0.0
    %238 = vmatpush1.msra.mxu0 %v219
    %239 = vmatprep.subr.mxu0 0.0
    %240 = vmatpush1.msra.mxu0 %v220
    %241 = vmatprep.subr.mxu0 0.0
    %242 = vmatpush1.msra.mxu0 0.0
    %243 = vmatprep.subr.mxu0 0.0
    %244 = vmatpush1.msra.mxu0 0.0
    %245 = vmatprep.subr.mxu0 0.0
    %246 = vmatpush1.msra.mxu0 0.0
    %247 = vmatprep.subr.mxu0 0.0
    %248 = vmatpush1.msra.mxu0 0.0
    %249 = vmatprep.subr.mxu0 0.0
    %250 = vmatpush1.msra.mxu0 0.0
    %251 = vmatprep.subr.mxu0 0.0
    %252 = vmatpush1.msra.mxu0 0.0
    %253 = vmatprep.subr.mxu0 0.0
    %254 = vmatpush1.msra.mxu0 0.0
    %255 = vmatprep.subr.mxu0 0.0
    %256 = vmatpush1.msra.mxu0 0.0
    %257 = vmatprep.subr.mxu0 0.0
    %258 = vmatpush1.msra.mxu0 0.0
    %259 = vmatprep.subr.mxu0 0.0
    %260 = vmatpush1.msra.mxu0 0.0
    %261 = vmatprep.subr.mxu0 0.0
    %262 = vmatpush1.msra.mxu0 0.0
    %263 = vmatprep.subr.mxu0 0.0
    %264 = vmatpush1.msra.mxu0 0.0
    %265 = vmatprep.subr.mxu0 0.0
    %266 = vmatpush1.msra.mxu0 0.0
    %267 = vmatprep.subr.mxu0 0.0
    %268 = vmatpush1.msra.mxu0 0.0
    %269 = vmatprep.subr.mxu0 0.0
    %270 = vmatpush1.msra.mxu0 0.0
    %271 = vmatprep.subr.mxu0 0.0
    %272 = vmatpush1.msra.mxu0 0.0
    %273 = vmatprep.subr.mxu0 0.0
    %274 = vmatpush1.msra.mxu0 0.0
    %275 = vmatprep.subr.mxu0 0.0
    %276 = vmatpush1.msra.mxu0 0.0
    %277 = vmatprep.subr.mxu0 0.0
    %278 = vmatpush1.msra.mxu0 0.0
    %279 = vmatprep.subr.mxu0 0.0
    %280 = vmatpush1.msra.mxu0 0.0
    %281 = vmatprep.subr.mxu0 0.0
    %282 = vmatpush1.msra.mxu0 0.0
    %283 = vmatprep.subr.mxu0 0.0
    %284 = vmatpush1.msra.mxu0 0.0
    %285 = vmatprep.subr.mxu0 0.0
    %286 = vmatpush1.msra.mxu0 0.0
    %287 = vmatprep.subr.mxu0 0.0
    %288 = vmatpush1.msra.mxu0 0.0
    %289 = vmatprep.mubr.f32.mxu0 0.0
    %290 = vmatmul.mubr.f32.gmra.mrb[0].mxu0 %v223
    %v291 = vpop.f32.mrb[0].mxu0
    %v292 = vadd.f32 0.0, %v291
    %v293 = vpop.f32.mrb[0].mxu0
    %294 = vdwg.mxu0
    %v295 = vmax.f32 %v292, 1e-24
    %v296 = vrsqrt.pop %v295
    %v297 = vmul.f32 %v209, %v296
    %298 = vst.msk [vmem:[#allocation2] sm:$0xff] %vm221, %v297
    // Predicated region
    $region26: #{tpu_custom_call.1} parent=1 // pred_check
      _
    $region27: #{tpu_custom_call.1} parent=1 // pred_check_branch
      %300 = sbr.rel (0) target = $region29
    $region28: #{tpu_custom_call.1} parent=1 // pred_region
      %s302 = ssub.s32 128, 32
      %303 = vsyncadd [#allocation3], %s302
      %s304 = sshll.u32 [#allocation2], 4
      %s305 = int_to_ptr.vmem [resolvable:$true] %s304
      %310 = dma.vmem_to_hbm [thread:$0]  %s305, 32, %s6, [#allocation3], 32, 32, 2
    $region29: #{tpu_custom_call.1} parent=1 // pred_fallthru
      _
    // Predicated region
    $region30: #{tpu_custom_call.1} parent=1 // pred_check
      _
    $region31: #{tpu_custom_call.1} parent=1 // pred_check_branch
      %312 = sbr.rel (0) target = $region33
    $region32: #{tpu_custom_call.1} parent=1 // pred_region
      %313 = dma.done [#allocation3], 128
    $region33: #{tpu_custom_call.1} parent=1 // pred_fallthru
      _
    %314 = vsyncpa [#allocation3], 1

</llo_original>
